<compile_context>
chip_gen: v5e
topology: v5e:2x2
jax: 0.10.0
libtpu: 0.0.40
codegen_flags: <defaults>
</compile_context>

<pallas_src>
import jax
import jax.numpy as jnp
from jax.experimental import pallas as pl
from jax.experimental.pallas import tpu as pltpu


def _layernorm_kernel(x_ref, scale_ref, shift_ref, o_ref):
    # x_ref: (ROW_TILE, D) tile in VMEM; scale/shift: (1, D), resident.
    x = x_ref[...].astype(jnp.float32)
    mean = jnp.mean(x, axis=-1, keepdims=True)
    # unbiased=False -> population variance (divide by D)
    var = jnp.mean((x - mean) ** 2, axis=-1, keepdims=True)
    inv_std = jax.lax.rsqrt(var + 1e-05)
    scale = scale_ref[...].astype(jnp.float32)
    shift = shift_ref[...].astype(jnp.float32)
    o_ref[...] = (scale * ((x - mean) * inv_std) + shift).astype(o_ref.dtype)


def _pick_row_tile(rows, d, itemsize, budget_bytes=40 << 20):
    """Pick a row tile sized against a conservative VMEM budget.

    Per tile row we account for: double-buffered input + double-buffered
    output in the input dtype (4 * itemsize) plus ~2 f32 working copies
    inside the kernel body (2 * 4 bytes).
    """
    per_row_bytes = d * (4 * itemsize + 2 * 4)
    t = max(int(budget_bytes // max(per_row_bytes, 1)), 8)
    t = min(t, 1024)  # diminishing returns past ~512-1024 rows
    if rows >= 64:
        # Keep >= 2 grid steps so the parallel axis can be split across
        # v7x's two TensorCores.
        t = min(t, max(rows // 2, 8))
    if t >= rows:
        # Single full-extent block: always a legal block shape.
        return rows
    # Multiple of 32 keeps sublane packing dense for f32/bf16/int8 inputs.
    t = max((t // 32) * 32, 8)
    return t


def layernorm(x, scale, shift, *, row_tile=None):
    """LayerNorm over the last axis of x; scale/shift of shape (embed_dim,)."""
    orig_shape = x.shape
    d = orig_shape[-1]
    rows = 1
    for s in orig_shape[:-1]:
        rows *= s
    x2 = x.reshape(rows, d)
    scale2 = scale.reshape(1, d)
    shift2 = shift.reshape(1, d)

    if row_tile is None:
        row_tile = _pick_row_tile(rows, d, jnp.dtype(x.dtype).itemsize)

    num_tiles = pl.cdiv(rows, row_tile)

    out = pl.pallas_call(
        _layernorm_kernel,
        out_shape=jax.ShapeDtypeStruct((rows, d), x.dtype),
        grid=(num_tiles,),
        in_specs=[
            pl.BlockSpec((row_tile, d), lambda i: (i, 0)),
            pl.BlockSpec((1, d), lambda i: (0, 0)),   # scale: resident
            pl.BlockSpec((1, d), lambda i: (0, 0)),   # shift: resident
        ],
        out_specs=pl.BlockSpec((row_tile, d), lambda i: (i, 0)),
        compiler_params=pltpu.CompilerParams(
            dimension_semantics=("parallel",),
            # Above the default scoped limits (v5e 16 MiB / v6e,v7x 32 MiB)
            # but safely below v7x's 64 MiB physical VMEM.
            vmem_limit_bytes=48 << 20,
        ),
    )(x2, scale2, shift2)

    return out.reshape(orig_shape)


def _reference(x, scale, shift):
    mean = jnp.mean(x, axis=-1, keepdims=True)
    var = jnp.mean((x - mean) ** 2, axis=-1, keepdims=True)
    return scale * ((x - mean) / jnp.sqrt(var + 1e-05)) + shift


if __name__ == "__main__":
    key = jax.random.PRNGKey(0)
    batch, seq, embed_dim = 2, 8, 128  # lane-dense last dim (multiple of 128)

    x = jax.random.normal(key, (batch, seq, embed_dim), dtype=jnp.float32)
    # Deterministic parameter init matching nn.Module.__init__:
    scale = jnp.ones((embed_dim,), dtype=jnp.float32)
    shift = jnp.zeros((embed_dim,), dtype=jnp.float32)

    out = layernorm(x, scale, shift)
    jax.block_until_ready(out)

    ref = _reference(x, scale, shift)
    assert out.shape == x.shape and out.dtype == x.dtype
    assert jnp.allclose(out, ref, atol=1e-5, rtol=1e-5)

    # Exercise the ragged-rows path (rows not a multiple of row_tile) to check
    # that masked writeback of the partial last block never writes past `rows`.
    x_ragged = jax.random.normal(
        jax.random.PRNGKey(1), (2, 11, embed_dim), dtype=jnp.float32
    )
    out_ragged = layernorm(x_ragged, scale, shift, row_tile=8)
    jax.block_until_ready(out_ragged)
    ref_ragged = _reference(x_ragged, scale, shift)
    assert out_ragged.shape == x_ragged.shape
    assert jnp.allclose(out_ragged, ref_ragged, atol=1e-5, rtol=1e-5)

    print("KERNEL_OK")
</pallas_src>

<mosaic_0001>
module attributes {stable_mosaic.version = 11 : i64} {
  func.func @_layernorm_kernel(%arg0: i32, %arg1: memref<16x128xf32, #tpu.memory_space<vmem>>, %arg2: memref<1x128xf32, #tpu.memory_space<vmem>>, %arg3: memref<1x128xf32, #tpu.memory_space<vmem>>, %arg4: memref<16x128xf32, #tpu.memory_space<vmem>>) attributes {dimension_semantics = [#tpu.dimension_semantics<parallel>], iteration_bounds = array<i64: 1>, scalar_prefetch = 0 : i64, scratch_operands = 0 : i64, tpu.core_type = #tpu.core_type<tc>, window_params = [{transform_indices = @transform_0, window_bounds = array<i64: 16, 128>}, {pipeline_mode = #tpu.pipeline_mode<synchronous>, transform_indices = @transform_1, window_bounds = array<i64: 1, 128>}, {pipeline_mode = #tpu.pipeline_mode<synchronous>, transform_indices = @transform_2, window_bounds = array<i64: 1, 128>}, {transform_indices = @transform_3, window_bounds = array<i64: 16, 128>}]} {
    %c0 = arith.constant 0 : index
    %c0_0 = arith.constant 0 : index
    %0 = vector.load %arg1[%c0, %c0_0] : memref<16x128xf32, #tpu.memory_space<vmem>>, vector<16x128xf32>
    %cst = arith.constant dense<0.000000e+00> : vector<16xf32>
    %1 = vector.multi_reduction <add>, %0, %cst [1] : vector<16x128xf32> to vector<16xf32>
    %2 = vector.shape_cast %1 : vector<16xf32> to vector<16x1xf32>
    %cst_1 = arith.constant 1.280000e+02 : f32
    %3 = vector.broadcast %cst_1 : f32 to vector<16x1xf32>
    %4 = arith.divf %2, %3 : vector<16x1xf32>
    %5 = vector.broadcast %4 : vector<16x1xf32> to vector<16x128xf32>
    %6 = arith.subf %0, %5 : vector<16x128xf32>
    %7 = arith.mulf %6, %6 : vector<16x128xf32>
    %cst_2 = arith.constant dense<0.000000e+00> : vector<16xf32>
    %8 = vector.multi_reduction <add>, %7, %cst_2 [1] : vector<16x128xf32> to vector<16xf32>
    %9 = vector.shape_cast %8 : vector<16xf32> to vector<16x1xf32>
    %cst_3 = arith.constant 1.280000e+02 : f32
    %10 = vector.broadcast %cst_3 : f32 to vector<16x1xf32>
    %11 = arith.divf %9, %10 : vector<16x1xf32>
    %cst_4 = arith.constant 9.99999974E-6 : f32
    %12 = vector.broadcast %cst_4 : f32 to vector<16x1xf32>
    %13 = arith.addf %11, %12 : vector<16x1xf32>
    %14 = math.rsqrt %13 : vector<16x1xf32>
    %c0_5 = arith.constant 0 : index
    %c0_6 = arith.constant 0 : index
    %15 = vector.load %arg2[%c0_5, %c0_6] : memref<1x128xf32, #tpu.memory_space<vmem>>, vector<1x128xf32>
    %c0_7 = arith.constant 0 : index
    %c0_8 = arith.constant 0 : index
    %16 = vector.load %arg3[%c0_7, %c0_8] : memref<1x128xf32, #tpu.memory_space<vmem>>, vector<1x128xf32>
    %17 = vector.broadcast %4 : vector<16x1xf32> to vector<16x128xf32>
    %18 = arith.subf %0, %17 : vector<16x128xf32>
    %19 = vector.broadcast %14 : vector<16x1xf32> to vector<16x128xf32>
    %20 = arith.mulf %18, %19 : vector<16x128xf32>
    %21 = vector.broadcast %15 : vector<1x128xf32> to vector<16x128xf32>
    %22 = arith.mulf %21, %20 : vector<16x128xf32>
    %23 = vector.broadcast %16 : vector<1x128xf32> to vector<16x128xf32>
    %24 = arith.addf %22, %23 : vector<16x128xf32>
    %c0_9 = arith.constant 0 : index
    %c0_10 = arith.constant 0 : index
    %25 = vector.load %arg4[%c0_9, %c0_10] : memref<16x128xf32, #tpu.memory_space<vmem>>, vector<16x128xf32>
    tpu.vector_store %arg4[%c0_9, %c0_10], %24 {strides = array<i32>} : memref<16x128xf32, #tpu.memory_space<vmem>>, vector<16x128xf32>,
    return
  }
  func.func @transform_0(%arg0: i32) -> (i32, i32) {
    %c0_i32 = arith.constant 0 : i32
    %c0_i32_0 = arith.constant 0 : i32
    return %arg0, %c0_i32 : i32, i32
  }
  func.func @transform_1(%arg0: i32) -> (i32, i32) {
    %c0_i32 = arith.constant 0 : i32
    %c0_i32_0 = arith.constant 0 : i32
    %c0_i32_1 = arith.constant 0 : i32
    return %c0_i32, %c0_i32_0 : i32, i32
  }
  func.func @transform_2(%arg0: i32) -> (i32, i32) {
    %c0_i32 = arith.constant 0 : i32
    %c0_i32_0 = arith.constant 0 : i32
    %c0_i32_1 = arith.constant 0 : i32
    return %c0_i32, %c0_i32_0 : i32, i32
  }
  func.func @transform_3(%arg0: i32) -> (i32, i32) {
    %c0_i32 = arith.constant 0 : i32
    %c0_i32_0 = arith.constant 0 : i32
    return %arg0, %c0_i32 : i32, i32
  }
}

</mosaic_0001>

<llo_original>
// kernel: tpu_custom_call.1
$region0: #{tpu_custom_call.1}
  #allocation0 [shape = 'u32[]', space=smem, size = 0x4, offset = 0x4, fixed_abs, tag = 'smem constant byte address 0x4 - core index']
  #allocation1 [shape = 'u32[72,128]{1,0:T(1,128)}', space=vmem, size = 0x9000, scoped, tag = 'internal scratch']
  %s0 = inlined_call_operand.hbm [shape: f32[16,128], index: 0, kind: input, shape index: {}]
  %s1 = inlined_call_operand.hbm [shape: f32[1,128], index: 1, kind: input, shape index: {}]
  %s2 = inlined_call_operand.vmem [shape: f32[1,128], index: 2, kind: input, shape index: {}]
  %s3 = inlined_call_operand.hbm [shape: f32[16,128], index: 3, kind: output, shape index: {}]
  %s4 = sld [smem:[#allocation0]]
  $region30: #{tpu_custom_call.1} parent=0
    _
  %s6 = ssub.s32 1, %s4
  %s7 = scalar_select 0, %s6, %s4
  $region1: #{tpu_custom_call.1} parent=0
    #allocation2 [shape = 'u8[8192]{0}', space=vmem, size = 0x2000, scoped, tag = 'input window, operand 0, single buffered']
    #allocation3 [shape = 's32[1]{0}', space=sflag, size = 0x4, scoped, tag = 'scoped memory for tpu_custom_call.1']
    #allocation4 [shape = 's32[1]{0}', space=sflag, size = 0x4, scoped, tag = 'scoped memory for tpu_custom_call.1']
    #allocation5 [shape = 'u8[512]{0}', space=vmem, size = 0x400, scoped, tag = 'input window, operand 1, single buffered']
    #allocation6 [shape = 's32[1]{0}', space=sflag, size = 0x4, scoped, tag = 'scoped memory for tpu_custom_call.1']
    #allocation7 [shape = 'u8[8192]{0}', space=vmem, size = 0x2000, scoped, tag = 'output window, operand 0, single buffered']
    %8 = vsyncpa [#allocation3], 0
    %9 = vsyncpa [#allocation6], 0
    %10 = vsyncpa [#allocation4], 0
    // Predicated region
    $region2: #{tpu_custom_call.1} parent=1 // pred_check
      _
    $region3: #{tpu_custom_call.1} parent=1 // pred_check_branch
      %12 = sbr.rel (0) target = $region5
    $region4: #{tpu_custom_call.1} parent=1 // pred_region
      %14 = vsyncadd [#allocation3], 0
      %s15 = sshll.u32 %s0, 4
      %s16 = int_to_ptr.hbm [resolvable:$true] %s15
      %s17 = sshll.u32 [#allocation2], 4
      %s18 = int_to_ptr.vmem [resolvable:$true] %s17
      %23 = dma.hbm_to_vmem [thread:$0]  %s16, 256, %s18, [#allocation3], 128, 128, 8
    $region5: #{tpu_custom_call.1} parent=1 // pred_fallthru
      _
    // Predicated region
    $region6: #{tpu_custom_call.1} parent=1 // pred_check
      _
    $region7: #{tpu_custom_call.1} parent=1 // pred_check_branch
      %25 = sbr.rel (0) target = $region9
    $region8: #{tpu_custom_call.1} parent=1 // pred_region
      %27 = vsyncadd [#allocation6], 0
      %s29 = sshll.u32 %s1, 4
      %s30 = int_to_ptr.hbm [resolvable:$true] %s29
      %s31 = sshll.u32 [#allocation5], 4
      %s32 = int_to_ptr.vmem [resolvable:$true] %s31
      %34 = dma.hbm_to_vmem [thread:$0]  %s30, 16, %s32, [#allocation6]
    $region9: #{tpu_custom_call.1} parent=1 // pred_fallthru
      _
    // Predicated region
    $region10: #{tpu_custom_call.1} parent=1 // pred_check
      _
    $region11: #{tpu_custom_call.1} parent=1 // pred_check_branch
      %36 = sbr.rel (0) target = $region13
    $region12: #{tpu_custom_call.1} parent=1 // pred_region
      _
    $region13: #{tpu_custom_call.1} parent=1 // pred_fallthru
      _
    // Predicated region
    $region14: #{tpu_custom_call.1} parent=1 // pred_check
      _
    $region15: #{tpu_custom_call.1} parent=1 // pred_check_branch
      %38 = sbr.rel (0) target = $region17
    $region16: #{tpu_custom_call.1} parent=1 // pred_region
      %40 = dma.done [#allocation3], 256
    $region17: #{tpu_custom_call.1} parent=1 // pred_fallthru
      _
    // Predicated region
    $region18: #{tpu_custom_call.1} parent=1 // pred_check
      _
    $region19: #{tpu_custom_call.1} parent=1 // pred_check_branch
      %42 = sbr.rel (0) target = $region21
    $region20: #{tpu_custom_call.1} parent=1 // pred_region
      %44 = dma.done [#allocation6], 16
    $region21: #{tpu_custom_call.1} parent=1 // pred_fallthru
      _
    %v45 = vld [vmem:[#allocation2] sm:$0xff]
    %v46 = vld [vmem:[#allocation2 + $0x8] sm:$0xff]
    %47 = vadd.xlane.f32.xlu0 %v45
    %v48 = vpop.xlane.xlu0 %47
    %49 = vadd.xlane.f32.xlu0 %v46
    %v50 = vpop.xlane.xlu0 %49
    %v51 = vrcp.pop 128.0
    %v52 = vmul.f32 128.0, %v51
    %v53 = vsub.f32 1.0, %v52
    %v54 = vmul.f32 %v51, %v53
    %v55 = vadd.f32 %v51, %v54
    %vm56 = vweird.f32 %v51
    %v57 = vsel %vm56, %v51, %v55
    %v58 = vmul.f32 %v48, %v57
    %v59 = vmul.f32 %v50, %v57
    %v60 = vsub.f32 %v45, %v58
    %v61 = vsub.f32 %v46, %v59
    %v62 = vmul.f32 %v60, %v60
    %v63 = vmul.f32 %v61, %v61
    %64 = vadd.xlane.f32.xlu0 %v62
    %v65 = vpop.xlane.xlu0 %64
    %66 = vadd.xlane.f32.xlu0 %v63
    %v67 = vpop.xlane.xlu0 %66
    %v68 = vmul.f32 %v65, %v57
    %v69 = vmul.f32 %v67, %v57
    %v70 = vadd.f32 %v68, 1e-05
    %v71 = vadd.f32 %v69, 1e-05
    %v72 = vrsqrt.pop %v70
    %v73 = vmul.f32 %v72, %v70
    %v74 = vmul.f32 %v73, %v72
    %v75 = vmul.f32 0.5, %v74
    %v76 = vsub.f32 1.5, %v75
    %v77 = vmul.f32 %v72, %v76
    %vm78 = vweird.f32 %v70
    %vm79 = vweird.f32 %v72
    %vm80 = vmor %vm78, %vm79
    %v81 = vsel %vm80, %v72, %v77
    %v82 = vrsqrt.pop %v71
    %v83 = vmul.f32 %v82, %v71
    %v84 = vmul.f32 %v83, %v82
    %v85 = vmul.f32 0.5, %v84
    %v86 = vsub.f32 1.5, %v85
    %v87 = vmul.f32 %v82, %v86
    %vm88 = vweird.f32 %v71
    %vm89 = vweird.f32 %v82
    %vm90 = vmor %vm88, %vm89
    %v91 = vsel %vm90, %v82, %v87
    %v92 = vld [vmem:[#allocation5] sm:$0x1]
    %v93 = vld [vmem:[%s2] sm:$0x1]
    %v94 = vmul.f32 %v60, %v81
    %v95 = vmul.f32 %v61, %v91
    %v97 = vperm.slane %v92, 0
    %v99 = vmul.f32 %v97, %v94
    %v100 = vmul.f32 %v97, %v95
    %v102 = vperm.slane %v93, 0
    %v104 = vadd.f32 %v99, %v102
    %v105 = vadd.f32 %v100, %v102
    %106 = vst [vmem:[#allocation7] sm:$0xff] %v104
    %107 = vst [vmem:[#allocation7 + $0x8] sm:$0xff] %v105
    // Predicated region
    $region22: #{tpu_custom_call.1} parent=1 // pred_check
      _
    $region23: #{tpu_custom_call.1} parent=1 // pred_check_branch
      %109 = sbr.rel (0) target = $region25
    $region24: #{tpu_custom_call.1} parent=1 // pred_region
      %111 = vsyncadd [#allocation4], 0
      %s112 = sshll.u32 [#allocation7], 4
      %s113 = int_to_ptr.vmem [resolvable:$true] %s112
      %s114 = sshll.u32 %s3, 4
      %s115 = int_to_ptr.hbm [resolvable:$true] %s114
      %120 = dma.vmem_to_hbm [thread:$0]  %s113, 256, %s115, [#allocation4], 128, 128, 8
    $region25: #{tpu_custom_call.1} parent=1 // pred_fallthru
      _
    // Predicated region
    $region26: #{tpu_custom_call.1} parent=1 // pred_check
      _
    $region27: #{tpu_custom_call.1} parent=1 // pred_check_branch
      %122 = sbr.rel (0) target = $region29
    $region28: #{tpu_custom_call.1} parent=1 // pred_region
      %124 = dma.done [#allocation4], 256
    $region29: #{tpu_custom_call.1} parent=1 // pred_fallthru
      _
    %125 = vsyncpa [#allocation3], 1
    %126 = vsyncpa [#allocation6], 1
    %127 = vsyncpa [#allocation4], 1

</llo_original>
